<compile_context>
chip_gen: v7x
topology: tpu7x:2x2x1
jax: 0.10.0
libtpu: 0.0.40
codegen_flags: <defaults>
</compile_context>

<pallas_src>
import functools

import jax
import jax.numpy as jnp
from jax.experimental import pallas as pl
from jax.experimental.pallas import tpu as pltpu


def _round_up(x, m):
    return (x + m - 1) // m * m


def _vmem_capacity_bytes():
    try:
        return int(pltpu.get_tpu_info().vmem_capacity_bytes)
    except Exception:
        return 64 * 1024 * 1024   # v7x is the smallest (64 MiB per TensorCore)


# --------------------------- shared tile compute ---------------------------- #
def _conv_bn_elu_tile(load_tap, w2d, bias, *, tap_offsets, tm, cin, fuse_k):
    """Fused dilated-conv + folded-BN + ELU on one lane-dense spatial tile.

    load_tap(off) -> bf16 (Cin, TM) input slice for tap offset `off`.
    w2d  : bf16 (Cout, KH*KW*Cin) BN-folded conv weight.
    bias : f32  (Cout, 1) folded bias.
    Returns f32 (Cout, TM).
    """
    taps = [load_tap(off) for off in tap_offsets]                  # bf16 slices
    if fuse_k:
        # One MXU matmul with K = KH*KW*Cin (bf16 x bf16 -> f32 accumulate).
        stacked = jnp.concatenate(taps, axis=0)                    # (K*Cin, TM)
        acc = jnp.dot(w2d, stacked, preferred_element_type=jnp.float32)
    else:
        # Per-tap fallback for very large Cin (stacking copy not worth it).
        cout = w2d.shape[0]
        acc = jnp.zeros((cout, tm), jnp.float32)
        for i, xt in enumerate(taps):                              # static unroll
            acc = acc + jnp.dot(w2d[:, i * cin:(i + 1) * cin], xt,
                                preferred_element_type=jnp.float32)
    y = acc + bias                                                 # folded BN+bias
    # ELU (alpha=1).  exp(min(y,0))-1 == expm1 to <1e-7 and always lowers; the
    # min() clamp also keeps the wrapped "garbage" columns finite.
    return jnp.where(y > 0.0, y, jnp.exp(jnp.minimum(y, 0.0)) - 1.0)


# --------------------- auto-pipelined kernel (small images) ----------------- #
def _auto_kernel(x_ref, w_ref, b_ref, o_ref, *,
                 tap_offsets, tm, n_inner, cin, fuse_k):
    """grid=(N,): whole padded image auto-DMA'd to VMEM by BlockSpec."""
    w2d = w_ref[...]
    bias = b_ref[...]
    for j in range(n_inner):                                       # static unroll
        base = j * tm
        y = _conv_bn_elu_tile(
            lambda off, base=base: x_ref[0, :, pl.ds(base + off, tm)],
            w2d, bias, tap_offsets=tap_offsets, tm=tm, cin=cin, fuse_k=fuse_k)
        o_ref[0, :, pl.ds(base, tm)] = y.astype(o_ref.dtype)


# ------------------- manual halo-DMA kernel (large images) ------------------ #
def _manual_kernel(x_hbm, w_ref, b_ref, o_ref, xbuf, sem, *,
                   tap_offsets, tm, l_in, cin, fuse_k):
    """grid=(batch, spatial_tiles): overlapping halo windows via manual DMA."""
    n = pl.program_id(0)
    t = pl.program_id(1)
    n_tiles = pl.num_programs(1)
    slot = jax.lax.rem(t, 2)

    def _start(tile_idx, sl):
        pltpu.make_async_copy(
            x_hbm.at[n, :, pl.ds(tile_idx * tm, l_in)],
            xbuf.at[sl], sem.at[sl]).start()

    # Prime the per-image DMA chain (the chain never crosses the batch axis, so
    # the batch grid dimension stays megacore-"parallel").
    # TODO(synk): cross-image prefetch (start (n+1, 0) at the last tile of n)
    # needs per-core first-iteration detection to stay deadlock-free under
    # megacore batch sharding; left out, costs one exposed DMA per image.
    @pl.when(t == 0)
    def _():
        _start(0, 0)

    # Wait for the current halo window.
    pltpu.make_async_copy(
        x_hbm.at[n, :, pl.ds(t * tm, l_in)], xbuf.at[slot], sem.at[slot]).wait()

    # Prefetch the next window of the same image while this one is computed.
    @pl.when(t + 1 < n_tiles)
    def _():
        _start(t + 1, 1 - slot)

    x_win = xbuf.at[slot]                      # bf16 window Ref -- no f32 cast
    y = _conv_bn_elu_tile(
        lambda off: x_win[:, pl.ds(off, tm)],
        w_ref[...], b_ref[...],
        tap_offsets=tap_offsets, tm=tm, cin=cin, fuse_k=fuse_k)
    o_ref[0] = y.astype(o_ref.dtype)


# ------------------------ fused pad/conv/BN/ELU wrapper ---------------------- #
def _fused_pad_dilated_conv_bn_elu(x_nchw, params, *, kernel_size, dilation,
                                   eps, tile_lanes, force_manual, fuse_k):
    """pad(p) -> Conv2d(k, stride=1, dilation) -> BN(eval) -> ELU, fused."""
    w = params["conv_w"].astype(jnp.float32)       # (Cout, Cin, KH, KW)
    cb = params["conv_b"].astype(jnp.float32)
    gamma = params["bn_gamma"].astype(jnp.float32)
    beta = params["bn_beta"].astype(jnp.float32)
    mean = params["bn_mean"].astype(jnp.float32)
    var = params["bn_var"].astype(jnp.float32)

    N, Cin, H, W = x_nchw.shape
    Cout, _, KH, KW = w.shape
    khkw = KH * KW
    p = (kernel_size - 1) // 2
    x_pad = jnp.pad(x_nchw, ((0, 0), (0, 0), (p, p), (p, p)))
    Hp, Wp = H + 2 * p, W + 2 * p
    OH = Hp - (KH - 1) * dilation                  # stride 1, VALID on padded
    OW = Wp - (KW - 1) * dilation

    # Flattened-spatial trick: output (oh, ow) reads input (oh+kh*d, ow+kw*d);
    # flat (row-major Hp*Wp) coords make every tap a constant shift.  Columns
    # ow >= OW wrap into the next row (garbage) and are trimmed afterwards.
    l_out = OH * Wp
    l_out_pad = _round_up(l_out, 128)
    l_extra = (KH - 1) * dilation * Wp + (KW - 1) * dilation

    vmem_cap = _vmem_capacity_bytes()
    vmem_budget = vmem_cap // 4                    # headroom for temporaries

    if tile_lanes is None:
        # Derive the lane-tile from the VMEM budget (bigger tiles amortize the
        # halo re-read l_extra/tm and the per-grid-step overhead).
        per_lane = (2 * Cin * 2            # double-buffered bf16 input window
                    + 2 * Cout * 2         # double-buffered bf16 output block
                    + 2 * khkw * Cin * 2   # stacked operand + tap temporaries
                    + Cout * 4)            # f32 accumulator
        fixed = 2 * Cin * l_extra * 2 + Cout * khkw * Cin * 2
        tm = max(128, min(4096, (vmem_budget - fixed) // per_lane // 128 * 128))
    else:
        assert tile_lanes % 128 == 0
        tm = tile_lanes
    tm = min(tm, l_out_pad)
    n_tiles = -(-l_out // tm)
    l_in = tm + l_extra
    l_total = n_tiles * tm + l_extra
    out_len = n_tiles * tm

    x_flat = x_pad.reshape(N, Cin, Hp * Wp)
    x_flat = jnp.pad(x_flat, ((0, 0), (0, 0), (0, l_total - Hp * Wp)))
    x_flat = x_flat.astype(jnp.bfloat16)           # bf16 activations in HBM

    # Fold BatchNorm (inference) + conv bias into the weights:
    #   ((conv(x)+cb)-mean)*s + beta == conv_{w*s}(x) + ((cb-mean)*s+beta),
    # s = gamma * rsqrt(var + eps).  Weights -> bf16 (MXU-native), bias f32.
    s = gamma * jax.lax.rsqrt(var + eps)
    w2d = (jnp.transpose(w, (0, 2, 3, 1)).reshape(Cout, khkw * Cin)
           * s[:, None]).astype(jnp.bfloat16)                       # (Cout, K*Cin)
    bias = ((cb - mean) * s + beta).reshape(Cout, 1).astype(jnp.float32)

    tap_offsets = tuple(kh * dilation * Wp + kw * dilation
                        for kh in range(KH) for kw in range(KW))

    if fuse_k is None:
        fuse_k = khkw * Cin <= 1024                # stacking cheap vs matmul win

    cost = pl.CostEstimate(
        flops=2 * N * OH * OW * khkw * Cin * Cout,
        transcendentals=N * OH * OW * Cout,
        bytes_accessed=(x_flat.size * 2 + w2d.size * 2 + bias.size * 4
                        + N * Cout * out_len * 2),
    )

    # Small-image path: whole (Cin, l_total) image fits VMEM -> plain BlockSpec
    # auto-pipelining across batch, no manual DMA, every axis "parallel".
    auto_bytes = (2 * Cin * l_total * 2 + 2 * Cout * out_len * 2
                  + 2 * khkw * Cin * tm * 2 + Cout * tm * 4)
    use_auto = (not force_manual) and auto_bytes <= vmem_budget

    # Never below the default scoped limit (32 MiB), capped to 3/4 of physical
    # (v7x: 64 MiB, v5e/v6e: 128 MiB); lifts v5e's 16 MiB default for big tiles.
    vmem_limit = int(min(max(32 * 1024 * 1024, 4 * auto_bytes),
                         vmem_cap * 3 // 4))

    if use_auto:
        kernel = functools.partial(
            _auto_kernel, tap_offsets=tap_offsets, tm=tm, n_inner=n_tiles,
            cin=Cin, fuse_k=fuse_k)
        out = pl.pallas_call(
            kernel,
            out_shape=jax.ShapeDtypeStruct((N, Cout, out_len), jnp.bfloat16),
            grid=(N,),
            in_specs=[
                pl.BlockSpec((1, Cin, l_total), lambda n: (n, 0, 0)),
                pl.BlockSpec((Cout, khkw * Cin), lambda n: (0, 0)),
                pl.BlockSpec((Cout, 1), lambda n: (0, 0)),
            ],
            out_specs=pl.BlockSpec((1, Cout, out_len), lambda n: (n, 0, 0)),
            compiler_params=pltpu.CompilerParams(
                dimension_semantics=("parallel",),
                vmem_limit_bytes=vmem_limit),
            cost_estimate=cost,
        )(x_flat, w2d, bias)
    else:
        kernel = functools.partial(
            _manual_kernel, tap_offsets=tap_offsets, tm=tm, l_in=l_in,
            cin=Cin, fuse_k=fuse_k)
        out = pl.pallas_call(
            kernel,
            out_shape=jax.ShapeDtypeStruct((N, Cout, out_len), jnp.bfloat16),
            grid=(N, n_tiles),
            in_specs=[
                pl.BlockSpec(memory_space=pl.ANY),                  # x in HBM
                pl.BlockSpec((Cout, khkw * Cin), lambda n, t: (0, 0)),
                pl.BlockSpec((Cout, 1), lambda n, t: (0, 0)),
            ],
            out_specs=pl.BlockSpec((1, Cout, tm), lambda n, t: (n, 0, t)),
            scratch_shapes=[
                pltpu.VMEM((2, Cin, l_in), jnp.bfloat16),
                pltpu.SemaphoreType.DMA((2,)),
            ],
            compiler_params=pltpu.CompilerParams(
                dimension_semantics=("parallel", "arbitrary"),
                vmem_limit_bytes=vmem_limit),
            cost_estimate=cost,
        )(x_flat, w2d, bias)

    # Trim wrapped columns + tail padding (bf16: half the old f32 copy traffic).
    # TODO(synk): a row-aligned (tm % Wp == 0) store of only the OW valid lanes
    # would remove this trim entirely but needs masked vst (OW % 128 != 0).
    out = out[:, :, :l_out].reshape(N, Cout, OH, Wp)[:, :, :, :OW]
    return out


# --------------------- bilinear upsample (align_corners=True) --------------- #
def _linear_interp_matrix(n_in, n_out):
    """1-D linear interpolation operator rows, align_corners=True."""
    if n_in == 1:
        return jnp.ones((n_out, 1), jnp.float32)
    if n_out == 1:
        return jnp.zeros((1, n_in), jnp.float32).at[0, 0].set(1.0)
    src = jnp.arange(n_out, dtype=jnp.float32) * (n_in - 1) / (n_out - 1)
    lo = jnp.clip(jnp.floor(src).astype(jnp.int32), 0, n_in - 2)
    frac = src - lo.astype(jnp.float32)
    rows = jnp.arange(n_out)
    m = jnp.zeros((n_out, n_in), jnp.float32)
    m = m.at[rows, lo].add(1.0 - frac)
    m = m.at[rows, lo + 1].add(frac)
    return m


def _bilinear_upsample_align_corners(x_nchw, scale):
    """nn.functional.interpolate(mode='bilinear', align_corners=True)."""
    # TODO(synk): bilinear resize stays plain-JAX glue (two separable dense
    # interpolation matmuls); under jit it fuses with the bf16 cast / pad.
    _, _, H, W = x_nchw.shape
    mh = _linear_interp_matrix(H, int(H * scale))
    mw = _linear_interp_matrix(W, int(W * scale))
    return jnp.einsum("oh,nchw,pw->ncop", mh, x_nchw, mw,
                      precision=jax.lax.Precision.HIGHEST)


# ------------------------------ top-level forward --------------------------- #
@functools.partial(jax.jit, static_argnames=(
    "kernel_size", "scale", "dilation", "eps", "tile_lanes", "force_manual",
    "fuse_k"))
def upconv_dilate_forward(x_nchw, params, *, kernel_size, scale, dilation,
                          eps=1e-5, tile_lanes=None, force_manual=False,
                          fuse_k=None):
    """Forward of upconv_dilate (conv stride fixed to 1, as in the module).

    Returns bfloat16 activations (design choice: halves HBM writeback of the
    mem-bound fused kernel; accumulation inside the kernel is float32).
    """
    x_up = _bilinear_upsample_align_corners(x_nchw.astype(jnp.float32), scale)
    x_up = x_up.astype(jnp.bfloat16)    # emit the 4x-larger intermediate in bf16
    return _fused_pad_dilated_conv_bn_elu(
        x_up, params, kernel_size=kernel_size, dilation=dilation, eps=eps,
        tile_lanes=tile_lanes, force_manual=force_manual, fuse_k=fuse_k)


# --------------------------- pure-JAX reference ----------------------------- #
def _reference(x_nchw, params, *, kernel_size, scale, dilation, eps=1e-5):
    x_up = _bilinear_upsample_align_corners(x_nchw.astype(jnp.float32), scale)
    p = (kernel_size - 1) // 2
    x_pad = jnp.pad(x_up, ((0, 0), (0, 0), (p, p), (p, p)))
    # Mirror the kernel path's bf16 activation storage so the comparison
    # isolates kernel correctness from the intentional activation quantization.
    x_pad = x_pad.astype(jnp.bfloat16).astype(jnp.float32)
    y = jax.lax.conv_general_dilated(
        x_pad, params["conv_w"].astype(jnp.float32),
        window_strides=(1, 1), padding="VALID",
        rhs_dilation=(dilation, dilation),
        dimension_numbers=("NCHW", "OIHW", "NCHW"),
        precision=jax.lax.Precision.HIGHEST)
    y = y + params["conv_b"].reshape(1, -1, 1, 1)
    g = params["bn_gamma"].reshape(1, -1, 1, 1)
    b = params["bn_beta"].reshape(1, -1, 1, 1)
    m = params["bn_mean"].reshape(1, -1, 1, 1)
    v = params["bn_var"].reshape(1, -1, 1, 1)
    y = (y - m) * jax.lax.rsqrt(v + eps) * g + b
    return jnp.where(y > 0.0, y, jnp.expm1(y))


# --------------------------------- main ------------------------------------- #
if __name__ == "__main__":
    N, Cin, H, W = 2, 4, 16, 16
    Cout, kernel_size, scale, dilation = 8, 3, 2, 2

    key = jax.random.PRNGKey(0)
    k_x, k_w, k_b, k_g, k_be, k_m, k_v = jax.random.split(key, 7)

    x = jax.random.normal(k_x, (N, Cin, H, W), dtype=jnp.float32)
    params = {
        "conv_w": 0.1 * jax.random.normal(
            k_w, (Cout, Cin, kernel_size, kernel_size), jnp.float32),
        "conv_b": 0.1 * jax.random.normal(k_b, (Cout,), jnp.float32),
        "bn_gamma": 0.5 + jax.random.uniform(k_g, (Cout,), jnp.float32),
        "bn_beta": 0.1 * jax.random.normal(k_be, (Cout,), jnp.float32),
        # TODO(synk): BatchNorm2d uses inference-mode running statistics;
        # training-mode batch statistics would need a cross-batch reduction.
        "bn_mean": 0.1 * jax.random.normal(k_m, (Cout,), jnp.float32),
        "bn_var": 0.5 + jax.random.uniform(k_v, (Cout,), jnp.float32),
    }

    ref = _reference(
        x, params, kernel_size=kernel_size, scale=scale, dilation=dilation)

    # Exercise every code path:
    #   1) auto-pipelined full-image path, fused-K matmul (default).
    #   2) manual halo-DMA path (forced), multi-tile, fused-K matmul.
    #   3) manual halo-DMA path, per-tap fallback matmuls.
    configs = (
        dict(),
        dict(force_manual=True, tile_lanes=256),
        dict(force_manual=True, tile_lanes=256, fuse_k=False),
    )
    for cfg in configs:
        out = upconv_dilate_forward(
            x, params, kernel_size=kernel_size, scale=scale, dilation=dilation,
            **cfg)
        out = jax.block_until_ready(out)
        assert out.shape == ref.shape, (cfg, out.shape, ref.shape)
        assert out.dtype == jnp.bfloat16, out.dtype
        max_err = float(jnp.max(jnp.abs(out.astype(jnp.float32) - ref)))
        # Tolerance sized for bf16 BN-folded weights + bf16 output rounding
        # (expected worst-case ~2e-2, typical ~3e-3); f32 accumulation inside.
        assert max_err < 5e-2, (cfg, max_err)

    print("KERNEL_OK")
</pallas_src>

<mosaic_0001>
module attributes {stable_mosaic.version = 11 : i64} {
  func.func private @main(%arg0: i32) attributes {dimension_semantics = [#tpu.dimension_semantics<core_parallel>], iteration_bounds = array<i64: 2>, tpu.core_type = #tpu.core_type<sc_scalar_subcore>, window_params = []} {
    return
  }
}

module attributes {stable_mosaic.version = 11 : i64} {
  func.func private @main(%arg0: i32) attributes {dimension_semantics = [#tpu.dimension_semantics<core_parallel>], iteration_bounds = array<i64: 2>, tpu.core_type = #tpu.core_type<sc_scalar_subcore>, window_params = []} {
    return
  }
}

module attributes {stable_mosaic.version = 11 : i64} {
  func.func @_auto_kernel(%arg0: i32, %arg1: memref<1x4x1164xbf16, #tpu.memory_space<vmem>>, %arg2: memref<8x36xbf16, #tpu.memory_space<vmem>>, %arg3: memref<8x1xf32, #tpu.memory_space<vmem>>, %arg4: memref<1x8x1024xbf16, #tpu.memory_space<vmem>>) attributes {dimension_semantics = [#tpu.dimension_semantics<parallel>], iteration_bounds = array<i64: 2>, scalar_prefetch = 0 : i64, scratch_operands = 0 : i64, tpu.core_type = #tpu.core_type<tc>, window_params = [{transform_indices = @transform_0, window_bounds = array<i64: 1, 4, 1164>}, {pipeline_mode = #tpu.pipeline_mode<synchronous>, transform_indices = @transform_1, window_bounds = array<i64: 8, 36>}, {pipeline_mode = #tpu.pipeline_mode<synchronous>, transform_indices = @transform_2, window_bounds = array<i64: 8, 1>}, {transform_indices = @transform_3, window_bounds = array<i64: 1, 8, 1024>}]} {
    %c0 = arith.constant 0 : index
    %c0_0 = arith.constant 0 : index
    %0 = vector.load %arg2[%c0, %c0_0] : memref<8x36xbf16, #tpu.memory_space<vmem>>, vector<8x36xbf16>
    %c0_1 = arith.constant 0 : index
    %c0_2 = arith.constant 0 : index
    %1 = vector.load %arg3[%c0_1, %c0_2] : memref<8x1xf32, #tpu.memory_space<vmem>>, vector<8x1xf32>
    %c0_3 = arith.constant 0 : index
    %c0_4 = arith.constant 0 : index
    %c0_5 = arith.constant 0 : index
    %2 = vector.load %arg1[%c0_3, %c0_4, %c0_5] : memref<1x4x1164xbf16, #tpu.memory_space<vmem>>, vector<1x4x1024xbf16>
    %3 = vector.shape_cast %2 : vector<1x4x1024xbf16> to vector<4x1024xbf16>
    %c0_6 = arith.constant 0 : index
    %c0_7 = arith.constant 0 : index
    %c2 = arith.constant 2 : index
    %4 = vector.load %arg1[%c0_6, %c0_7, %c2] : memref<1x4x1164xbf16, #tpu.memory_space<vmem>>, vector<1x4x1024xbf16>
    %5 = vector.shape_cast %4 : vector<1x4x1024xbf16> to vector<4x1024xbf16>
    %c0_8 = arith.constant 0 : index
    %c0_9 = arith.constant 0 : index
    %c4 = arith.constant 4 : index
    %6 = vector.load %arg1[%c0_8, %c0_9, %c4] : memref<1x4x1164xbf16, #tpu.memory_space<vmem>>, vector<1x4x1024xbf16>
    %7 = vector.shape_cast %6 : vector<1x4x1024xbf16> to vector<4x1024xbf16>
    %c0_10 = arith.constant 0 : index
    %c0_11 = arith.constant 0 : index
    %c68 = arith.constant 68 : index
    %8 = vector.load %arg1[%c0_10, %c0_11, %c68] : memref<1x4x1164xbf16, #tpu.memory_space<vmem>>, vector<1x4x1024xbf16>
    %9 = vector.shape_cast %8 : vector<1x4x1024xbf16> to vector<4x1024xbf16>
    %c0_12 = arith.constant 0 : index
    %c0_13 = arith.constant 0 : index
    %c70 = arith.constant 70 : index
    %10 = vector.load %arg1[%c0_12, %c0_13, %c70] : memref<1x4x1164xbf16, #tpu.memory_space<vmem>>, vector<1x4x1024xbf16>
    %11 = vector.shape_cast %10 : vector<1x4x1024xbf16> to vector<4x1024xbf16>
    %c0_14 = arith.constant 0 : index
    %c0_15 = arith.constant 0 : index
    %c72 = arith.constant 72 : index
    %12 = vector.load %arg1[%c0_14, %c0_15, %c72] : memref<1x4x1164xbf16, #tpu.memory_space<vmem>>, vector<1x4x1024xbf16>
    %13 = vector.shape_cast %12 : vector<1x4x1024xbf16> to vector<4x1024xbf16>
    %c0_16 = arith.constant 0 : index
    %c0_17 = arith.constant 0 : index
    %c136 = arith.constant 136 : index
    %14 = vector.load %arg1[%c0_16, %c0_17, %c136] : memref<1x4x1164xbf16, #tpu.memory_space<vmem>>, vector<1x4x1024xbf16>
    %15 = vector.shape_cast %14 : vector<1x4x1024xbf16> to vector<4x1024xbf16>
    %c0_18 = arith.constant 0 : index
    %c0_19 = arith.constant 0 : index
    %c138 = arith.constant 138 : index
    %16 = vector.load %arg1[%c0_18, %c0_19, %c138] : memref<1x4x1164xbf16, #tpu.memory_space<vmem>>, vector<1x4x1024xbf16>
    %17 = vector.shape_cast %16 : vector<1x4x1024xbf16> to vector<4x1024xbf16>
    %c0_20 = arith.constant 0 : index
    %c0_21 = arith.constant 0 : index
    %c140 = arith.constant 140 : index
    %18 = vector.load %arg1[%c0_20, %c0_21, %c140] : memref<1x4x1164xbf16, #tpu.memory_space<vmem>>, vector<1x4x1024xbf16>
    %19 = vector.shape_cast %18 : vector<1x4x1024xbf16> to vector<4x1024xbf16>
    %20 = tpu.concatenate %3, %5, %7, %9, %11, %13, %15, %17, %19 in 0 : vector<4x1024xbf16>, vector<4x1024xbf16>, vector<4x1024xbf16>, vector<4x1024xbf16>, vector<4x1024xbf16>, vector<4x1024xbf16>, vector<4x1024xbf16>, vector<4x1024xbf16>, vector<4x1024xbf16> -> vector<36x1024xbf16>
    %cst = arith.constant dense<0.000000e+00> : vector<8x1024xf32>
    %21 = tpu.matmul %0, %20, %cst {dimension_numbers = #tpu.dot_dimension_numbers<[1], [0], [0], [1], [0, 0, 1, 1], [], []>} : vector<8x36xbf16>, vector<36x1024xbf16>, vector<8x1024xf32> -> vector<8x1024xf32>
    %22 = vector.broadcast %1 : vector<8x1xf32> to vector<8x1024xf32>
    %23 = arith.addf %21, %22 : vector<8x1024xf32>
    %cst_22 = arith.constant 0.000000e+00 : f32
    %24 = vector.broadcast %cst_22 : f32 to vector<8x1024xf32>
    %25 = arith.cmpf ogt, %23, %24 : vector<8x1024xf32>
    %cst_23 = arith.constant 0.000000e+00 : f32
    %26 = vector.broadcast %cst_23 : f32 to vector<8x1024xf32>
    %27 = arith.minimumf %23, %26 : vector<8x1024xf32>
    %28 = math.exp %27 : vector<8x1024xf32>
    %cst_24 = arith.constant 1.000000e+00 : f32
    %29 = vector.broadcast %cst_24 : f32 to vector<8x1024xf32>
    %30 = arith.subf %28, %29 : vector<8x1024xf32>
    %31 = arith.select %25, %23, %30 : vector<8x1024xi1>, vector<8x1024xf32>
    %32 = arith.truncf %31 : vector<8x1024xf32> to vector<8x1024xbf16>
    %c0_25 = arith.constant 0 : index
    %c0_26 = arith.constant 0 : index
    %c0_27 = arith.constant 0 : index
    %33 = vector.load %arg4[%c0_25, %c0_26, %c0_27] : memref<1x8x1024xbf16, #tpu.memory_space<vmem>>, vector<1x8x1024xbf16>
    %34 = vector.shape_cast %33 : vector<1x8x1024xbf16> to vector<8x1024xbf16>
    %35 = vector.shape_cast %32 : vector<8x1024xbf16> to vector<1x8x1024xbf16>
    tpu.vector_store %arg4[%c0_25, %c0_26, %c0_27], %35 {strides = array<i32>} : memref<1x8x1024xbf16, #tpu.memory_space<vmem>>, vector<1x8x1024xbf16>,
    return
  }
  func.func @transform_0(%arg0: i32) -> (i32, i32, i32) {
    %c0_i32 = arith.constant 0 : i32
    %c0_i32_0 = arith.constant 0 : i32
    %c0_i32_1 = arith.constant 0 : i32
    return %arg0, %c0_i32, %c0_i32_0 : i32, i32, i32
  }
  func.func @transform_1(%arg0: i32) -> (i32, i32) {
    %c0_i32 = arith.constant 0 : i32
    %c0_i32_0 = arith.constant 0 : i32
    %c0_i32_1 = arith.constant 0 : i32
    return %c0_i32, %c0_i32_0 : i32, i32
  }
  func.func @transform_2(%arg0: i32) -> (i32, i32) {
    %c0_i32 = arith.constant 0 : i32
    %c0_i32_0 = arith.constant 0 : i32
    %c0_i32_1 = arith.constant 0 : i32
    return %c0_i32, %c0_i32_0 : i32, i32
  }
  func.func @transform_3(%arg0: i32) -> (i32, i32, i32) {
    %c0_i32 = arith.constant 0 : i32
    %c0_i32_0 = arith.constant 0 : i32
    %c0_i32_1 = arith.constant 0 : i32
    return %arg0, %c0_i32, %c0_i32_0 : i32, i32, i32
  }
}

</mosaic_0001>

<llo_original>
// kernel: upconv_dilate_forward.1
$region0: #{upconv_dilate_forward.1}
  #allocation0 [shape = 'u32[]', space=smem, size = 0x4, offset = 0x4, fixed_abs, tag = 'smem constant byte address 0x4 - core index']
  #allocation1 [shape = 'u32[144,128]{1,0:T(1,128)}', space=vmem, size = 0x12000, scoped, tag = 'internal scratch']
  %s0 = inlined_call_operand.vmem [shape: bf16[2,4,1164], index: 0, kind: input, shape index: {}]
  %s1 = inlined_call_operand.vmem [shape: bf16[8,36], index: 1, kind: input, shape index: {}]
  %s2 = inlined_call_operand.vmem [shape: f32[8,1], index: 2, kind: input, shape index: {}]
  %s3 = inlined_call_operand.vmem [shape: bf16[2,8,1024], index: 3, kind: output, shape index: {}]
  %s4 = sld [smem:[#allocation0]]
  $region45: #{upconv_dilate_forward.1} parent=0
    _
  %s6 = ssub.s32 1, %s4
  %s7 = scalar_select 0, %s6, %s4
  loop: start=0, step=1, limit=4
  $region2: #{upconv_dilate_forward.1} parent=0 // loop_pre_header
    _
  $region3: #{upconv_dilate_forward.1} parent=0 // loop_header
    %s9 = sphi 0, %s13
    %p10 = scmp.ge.s32.totalorder %s9, 4
    %s19 = sphi 0, %s21
    %s22 = sphi 0, %s19
    %s23 = sphi 0, %s22
    %s39 = sphi 0, %s23
    %s43 = sphi 0, %s43
    %s45 = sphi 0, %s43
    %s46 = sphi 0, %s45
    %s60 = sphi 0, %s46
    %s64 = sphi 0, %s64
    %s66 = sphi 0, %s64
    %s67 = sphi 0, %s66
    %s81 = sphi 0, %s67
    %s87 = sphi 0, %s89
    %s90 = sphi 0, %s87
    %s91 = sphi 0, %s90
    %s107 = sphi 0, %s91
  $region4: #{upconv_dilate_forward.1} parent=0 // loop_header_branch
    %12 = sbr.rel (%p10) target = $region8
  $region5: #{upconv_dilate_forward.1} parent=0 // loop_body
    %s14 = ssub.s32 %s9, 1
    %s15 = ssub.s32 %s9, 2
    %s16 = sadd.s32 %s9, 1
    %s17 = ssub.s32 %s9, %s16
    %p18 = scmp.eq.s32.totalorder %s17, 0
    %s20 = sadd.s32 %s19, 1
    %s21 = scalar_select %p18, %s19, %s20
    %p24 = pneg %p18
    %p25 = scmp.eq.s32.totalorder %s9, 1
    %p26 = por %p24, %p25
    %p27 = scmp.ne.s32.totalorder %s19, %s22
    %p28 = scmp.eq.s32.totalorder %s9, 0
    %p29 = por %p27, %p28
    %p30 = scmp.ne.s32.totalorder %s19, %s22
    %p31 = scmp.eq.s32.totalorder %s14, 1
    %p32 = por %p30, %p31
    %p33 = scmp.ne.s32.totalorder %s22, %s23
    %p34 = scmp.eq.s32.totalorder %s14, 0
    %p35 = por %p33, %p34
    %p36 = scmp.ne.s32.totalorder %s22, %s23
    %p37 = scmp.eq.s32.totalorder %s15, 1
    %p38 = por %p36, %p37
    %p40 = scmp.ne.s32.totalorder %s23, %s39
    %p41 = scmp.eq.s32.totalorder %s15, 0
    %p42 = por %p40, %p41
    %s44 = sadd.s32 %s43, 1
    %p47 = scmp.eq.s32.totalorder %s9, 1
    %p48 = scmp.ne.s32.totalorder %s43, %s45
    %p49 = scmp.eq.s32.totalorder %s9, 0
    %p50 = por %p48, %p49
    %p51 = scmp.ne.s32.totalorder %s43, %s45
    %p52 = scmp.eq.s32.totalorder %s14, 1
    %p53 = por %p51, %p52
    %p54 = scmp.ne.s32.totalorder %s45, %s46
    %p55 = scmp.eq.s32.totalorder %s14, 0
    %p56 = por %p54, %p55
    %p57 = scmp.ne.s32.totalorder %s45, %s46
    %p58 = scmp.eq.s32.totalorder %s15, 1
    %p59 = por %p57, %p58
    %p61 = scmp.ne.s32.totalorder %s46, %s60
    %p62 = scmp.eq.s32.totalorder %s15, 0
    %p63 = por %p61, %p62
    %s65 = sadd.s32 %s64, 1
    %p68 = scmp.eq.s32.totalorder %s9, 1
    %p69 = scmp.ne.s32.totalorder %s64, %s66
    %p70 = scmp.eq.s32.totalorder %s9, 0
    %p71 = por %p69, %p70
    %p72 = scmp.ne.s32.totalorder %s64, %s66
    %p73 = scmp.eq.s32.totalorder %s14, 1
    %p74 = por %p72, %p73
    %p75 = scmp.ne.s32.totalorder %s66, %s67
    %p76 = scmp.eq.s32.totalorder %s14, 0
    %p77 = por %p75, %p76
    %p78 = scmp.ne.s32.totalorder %s66, %s67
    %p79 = scmp.eq.s32.totalorder %s15, 1
    %p80 = por %p78, %p79
    %p82 = scmp.ne.s32.totalorder %s67, %s81
    %p83 = scmp.eq.s32.totalorder %s15, 0
    %p84 = por %p82, %p83
    %s85 = ssub.s32 %s9, %s16
    %p86 = scmp.eq.s32.totalorder %s85, 0
    %s88 = sadd.s32 %s87, 1
    %s89 = scalar_select %p86, %s87, %s88
    %p92 = pneg %p86
    %p93 = scmp.eq.s32.totalorder %s9, 1
    %p94 = por %p92, %p93
    %p95 = scmp.ne.s32.totalorder %s87, %s90
    %p96 = scmp.eq.s32.totalorder %s9, 0
    %p97 = por %p95, %p96
    %p98 = scmp.ne.s32.totalorder %s87, %s90
    %p99 = scmp.eq.s32.totalorder %s14, 1
    %p100 = por %p98, %p99
    %p101 = scmp.ne.s32.totalorder %s90, %s91
    %p102 = scmp.eq.s32.totalorder %s14, 0
    %p103 = por %p101, %p102
    %p104 = scmp.ne.s32.totalorder %s90, %s91
    %p105 = scmp.eq.s32.totalorder %s15, 1
    %p106 = por %p104, %p105
    %p108 = scmp.ne.s32.totalorder %s91, %s107
    %p109 = scmp.eq.s32.totalorder %s15, 0
    %p110 = por %p108, %p109
    %p111 = scmp.le.s32.totalorder 1, %s9
    %p112 = scmp.lt.s32.totalorder %s9, 3
    %p113 = pnand %p111, %p112
    %p114 = pneg %p113
    // Predicated region
    $region9: #{upconv_dilate_forward.1} parent=5 // pred_check
      _
    $region10: #{upconv_dilate_forward.1} parent=5 // pred_check_branch
      %116 = sbr.rel (%p113) target = $region12
    $region11: #{upconv_dilate_forward.1} parent=5 // pred_region
      %s117 = ssub.s32 %s9, 1
      // Predicated region
      $region13: #{upconv_dilate_forward.1} parent=11 // pred_check
        %p118 = pneg %p56
      $region14: #{upconv_dilate_forward.1} parent=11 // pred_check_branch
        %120 = sbr.rel (%p118) target = $region16
      $region15: #{upconv_dilate_forward.1} parent=11 // pred_region
        _
      $region16: #{upconv_dilate_forward.1} parent=11 // pred_fallthru
        _
      // Predicated region
      $region17: #{upconv_dilate_forward.1} parent=11 // pred_check
        %p121 = pneg %p77
      $region18: #{upconv_dilate_forward.1} parent=11 // pred_check_branch
        %123 = sbr.rel (%p121) target = $region20
      $region19: #{upconv_dilate_forward.1} parent=11 // pred_region
        _
      $region20: #{upconv_dilate_forward.1} parent=11 // pred_fallthru
        _
    $region12: #{upconv_dilate_forward.1} parent=5 // pred_fallthru
      _
    %p124 = scmp.lt.s32.totalorder %s9, 2
    // Predicated region
    $region21: #{upconv_dilate_forward.1} parent=5 // pred_check
      %p125 = pneg %p124
    $region22: #{upconv_dilate_forward.1} parent=5 // pred_check_branch
      %127 = sbr.rel (%p125) target = $region24
    $region23: #{upconv_dilate_forward.1} parent=5 // pred_region
      // Predicated region
      $region25: #{upconv_dilate_forward.1} parent=23 // pred_check
        %p128 = pneg %p29
      $region26: #{upconv_dilate_forward.1} parent=23 // pred_check_branch
        %130 = sbr.rel (%p128) target = $region28
      $region27: #{upconv_dilate_forward.1} parent=23 // pred_region
        %p131 = scmp.lt.s32.totalorder %s9, 1
        %s132 = scalar_select %p131, %s9, 1
        %s133 = smul.addr %s132, 10
        %s134 = smul.addr %s133, 2
        %s135 = scalar_lea.vmem %s0, %s134
      $region28: #{upconv_dilate_forward.1} parent=23 // pred_fallthru
        _
    $region24: #{upconv_dilate_forward.1} parent=5 // pred_fallthru
      _
    %p136 = scmp.le.s32.totalorder 1, %s9
    %p137 = scmp.lt.s32.totalorder %s9, 3
    %p138 = pnand %p136, %p137
    %p139 = pneg %p138
    // Predicated region
    $region29: #{upconv_dilate_forward.1} parent=5 // pred_check
      _
    $region30: #{upconv_dilate_forward.1} parent=5 // pred_check_branch
      %141 = sbr.rel (%p138) target = $region32
    $region31: #{upconv_dilate_forward.1} parent=5 // pred_region
      %s142 = ssub.s32 %s9, 1
      %p143 = scmp.lt.s32.totalorder %s14, 1
      %s144 = scalar_select %p143, %s14, 1
      %s145 = smul.addr %s144, 10
      %s146 = smul.addr %s145, 2
      %s147 = scalar_lea.vmem %s0, %s146
      %p148 = pneg %p35
      %p149 = pneg %p32
      %p150 = pneg %p56
      %p151 = pneg %p53
      %p152 = pneg %p77
      %p153 = pneg %p74
      %p154 = pneg %p103
      %p155 = pneg %p100
      %p156 = scmp.lt.s32.totalorder %s14, 1
      %s157 = scalar_select %p156, %s14, 1
      %s158 = smul.addr %s157, 8
      %s159 = smul.addr %s158, 4
      %s160 = scalar_lea.vmem %s3, %s159
      %p161 = scmp.lt.s32.totalorder %s14, 1
      %s162 = scalar_select %p161, %s14, 1
      %s163 = smul.addr %s162, 10
      %s164 = smul.addr %s163, 2
      %s165 = scalar_lea.vmem %s0, %s164
      %p166 = scmp.lt.s32.totalorder %s14, 1
      %s167 = scalar_select %p166, %s14, 1
      %s168 = smul.addr %s167, 8
      %s169 = smul.addr %s168, 4
      %s170 = scalar_lea.vmem %s3, %s169
      %v172 = vld [vmem:[%s1] sm:$0xf]
      %v173 = vld [vmem:[%s2] sm:$0xff]
      %v174 = vld [vmem:[%s165] sm:$0xff]
      %v175 = vld [vmem:[%s165 + $0x8] sm:$0xff]
      %v176 = vld [vmem:[%s165 + $0x10] sm:$0x3]
      %v177 = vld [vmem:[%s165 + $0x2] sm:$0xff]
      %v178 = vld [vmem:[%s165 + $0xa] sm:$0xff]
      %v179 = vld [vmem:[%s165 + $0x12] sm:$0x3]
      %v182 = vcombine.high %v174, %v174
      %v184 = vunpack.c.l.s4 1983009808
      %v185 = vunpack.c.0.s8 %v184
      %v186 = vlaneseq
      %v187 = vshrl.u32 %v186, 7
      %v188 = vsub.s32 %v185, %v187
      %v189 = vrot.slane %v174, %v188
      %v191 = vunpack.c.l.s4 1983009808
      %v192 = vunpack.c.0.s8 %v191
      %v193 = vlaneseq
      %v194 = vshrl.u32 %v193, 7
      %v195 = vsub.s32 %v192, %v194
      %v196 = vrot.slane %v182, %v195
      %v197 = vcombine.high %v189, %v189
      %v198 = vcombine.high %v196, %v196
      %v199 = vcombine.high %v175, %v175
      %v201 = vunpack.c.l.s4 1983009808
      %v202 = vunpack.c.0.s8 %v201
      %v203 = vlaneseq
      %v204 = vshrl.u32 %v203, 7
      %v205 = vsub.s32 %v202, %v204
      %v206 = vrot.slane %v175, %v205
      %v208 = vunpack.c.l.s4 1983009808
      %v209 = vunpack.c.0.s8 %v208
      %v210 = vlaneseq
      %v211 = vshrl.u32 %v210, 7
      %v212 = vsub.s32 %v209, %v211
      %v213 = vrot.slane %v199, %v212
      %v214 = vcombine.high %v206, %v206
      %v215 = vcombine.high %v213, %v213
      %v217 = vcombine.low %v174, %v174
      %v219 = vunpack.c.l.s4 1983009808
      %v220 = vunpack.c.0.s8 %v219
      %v221 = vlaneseq
      %v222 = vshrl.u32 %v221, 7
      %v223 = vsub.s32 %v220, %v222
      %v224 = vrot.slane %v217, %v223
      %v225 = vcombine.high %v224, %v224
      %v226 = vcombine.low %v175, %v175
      %v228 = vunpack.c.l.s4 1983009808
      %v229 = vunpack.c.0.s8 %v228
      %v230 = vlaneseq
      %v231 = vshrl.u32 %v230, 7
      %v232 = vsub.s32 %v229, %v231
      %v233 = vrot.slane %v226, %v232
      %v234 = vcombine.high %v233, %v233
      %v235 = vcombine.low %v176, %v176
      %v237 = vunpack.c.l.s4 1983009808
      %v238 = vunpack.c.0.s8 %v237
      %v239 = vlaneseq
      %v240 = vshrl.u32 %v239, 7
      %v241 = vsub.s32 %v238, %v240
      %v242 = vrot.slane %v235, %v241
      %v244 = vunpack.c.l.s4 1983009808
      %v245 = vunpack.c.0.s8 %v244
      %v246 = vlaneseq
      %v247 = vshrl.u32 %v246, 7
      %v248 = vsub.s32 %v245, %v247
      %v249 = vrot.slane %v176, %v248
      %250 = vrot.lane.b32.xlu0 %v224, 126
      %v251 = vpop.permute.xlu0 %250
      %252 = vrot.lane.b32.xlu0 %v225, 126
      %v253 = vpop.permute.xlu0 %252
      %254 = vrot.lane.b32.xlu0 %v189, 126
      %v255 = vpop.permute.xlu0 %254
      %256 = vrot.lane.b32.xlu0 %v197, 126
      %v257 = vpop.permute.xlu0 %256
      %258 = vrot.lane.b32.xlu0 %v233, 126
      %v259 = vpop.permute.xlu0 %258
      %260 = vrot.lane.b32.xlu0 %v234, 126
      %v261 = vpop.permute.xlu0 %260
      %262 = vrot.lane.b32.xlu0 %v206, 126
      %v263 = vpop.permute.xlu0 %262
      %264 = vrot.lane.b32.xlu0 %v214, 126
      %v265 = vpop.permute.xlu0 %264
      %266 = vrot.lane.b32.xlu0 %v242, 126
      %v267 = vpop.permute.xlu0 %266
      %vm268 = vcmask 1031168
      %v269 = vsel %vm268, %v251, %v253
      %v270 = vsel %vm268, %v253, %v255
      %v271 = vsel %vm268, %v255, %v257
      %v272 = vsel %vm268, %v257, %v259
      %v273 = vsel %vm268, %v259, %v261
      %v274 = vsel %vm268, %v261, %v263
      %v275 = vsel %vm268, %v263, %v265
      %v276 = vsel %vm268, %v265, %v267
      %v277 = vcombine.low %v189, %v189
      %v278 = vcombine.low %v196, %v196
      %v279 = vcombine.low %v206, %v206
      %v280 = vcombine.low %v213, %v213
      %v281 = vcombine.low %v249, %v249
      %282 = vrot.lane.b32.xlu0 %v277, 124
      %v283 = vpop.permute.xlu0 %282
      %284 = vrot.lane.b32.xlu0 %v189, 124
      %v285 = vpop.permute.xlu0 %284
      %286 = vrot.lane.b32.xlu0 %v278, 124
      %v287 = vpop.permute.xlu0 %286
      %288 = vrot.lane.b32.xlu0 %v196, 124
      %v289 = vpop.permute.xlu0 %288
      %290 = vrot.lane.b32.xlu0 %v279, 124
      %v291 = vpop.permute.xlu0 %290
      %292 = vrot.lane.b32.xlu0 %v206, 124
      %v293 = vpop.permute.xlu0 %292
      %294 = vrot.lane.b32.xlu0 %v280, 124
      %v295 = vpop.permute.xlu0 %294
      %296 = vrot.lane.b32.xlu0 %v213, 124
      %v297 = vpop.permute.xlu0 %296
      %298 = vrot.lane.b32.xlu0 %v281, 124
      %v299 = vpop.permute.xlu0 %298
      %vm300 = vcmask 1014784
      %v301 = vsel %vm300, %v283, %v285
      %v302 = vsel %vm300, %v285, %v287
      %v303 = vsel %vm300, %v287, %v289
      %v304 = vsel %vm300, %v289, %v291
      %v305 = vsel %vm300, %v291, %v293
      %v306 = vsel %vm300, %v293, %v295
      %v307 = vsel %vm300, %v295, %v297
      %v308 = vsel %vm300, %v297, %v299
      %v309 = vcombine.low %v224, %v224
      %v310 = vcombine.low %v233, %v233
      %v311 = vcombine.low %v242, %v242
      %312 = vrot.lane.b32.xlu0 %v309, 60
      %v313 = vpop.permute.xlu0 %312
      %314 = vrot.lane.b32.xlu0 %v224, 60
      %v315 = vpop.permute.xlu0 %314
      %316 = vrot.lane.b32.xlu0 %v277, 60
      %v317 = vpop.permute.xlu0 %316
      %318 = vrot.lane.b32.xlu0 %v189, 60
      %v319 = vpop.permute.xlu0 %318
      %320 = vrot.lane.b32.xlu0 %v310, 60
      %v321 = vpop.permute.xlu0 %320
      %322 = vrot.lane.b32.xlu0 %v233, 60
      %v323 = vpop.permute.xlu0 %322
      %324 = vrot.lane.b32.xlu0 %v279, 60
      %v325 = vpop.permute.xlu0 %324
      %326 = vrot.lane.b32.xlu0 %v206, 60
      %v327 = vpop.permute.xlu0 %326
      %328 = vrot.lane.b32.xlu0 %v311, 60
      %v329 = vpop.permute.xlu0 %328
      %vm330 = vcmask 490496
      %v331 = vsel %vm330, %v313, %v315
      %v332 = vsel %vm330, %v315, %v317
      %v333 = vsel %vm330, %v317, %v319
      %v334 = vsel %vm330, %v319, %v321
      %v335 = vsel %vm330, %v321, %v323
      %v336 = vsel %vm330, %v323, %v325
      %v337 = vsel %vm330, %v325, %v327
      %v338 = vsel %vm330, %v327, %v329
      %339 = vrot.lane.b32.xlu0 %v189, 58
      %v340 = vpop.permute.xlu0 %339
      %341 = vrot.lane.b32.xlu0 %v197, 58
      %v342 = vpop.permute.xlu0 %341
      %343 = vrot.lane.b32.xlu0 %v196, 58
      %v344 = vpop.permute.xlu0 %343
      %345 = vrot.lane.b32.xlu0 %v198, 58
      %v346 = vpop.permute.xlu0 %345
      %347 = vrot.lane.b32.xlu0 %v206, 58
      %v348 = vpop.permute.xlu0 %347
      %349 = vrot.lane.b32.xlu0 %v214, 58
      %v350 = vpop.permute.xlu0 %349
      %351 = vrot.lane.b32.xlu0 %v213, 58
      %v352 = vpop.permute.xlu0 %351
      %353 = vrot.lane.b32.xlu0 %v215, 58
      %v354 = vpop.permute.xlu0 %353
      %355 = vrot.lane.b32.xlu0 %v249, 58
      %v356 = vpop.permute.xlu0 %355
      %vm357 = vcmask 474112
      %v358 = vsel %vm357, %v340, %v342
      %v359 = vsel %vm357, %v342, %v344
      %v360 = vsel %vm357, %v344, %v346
      %v361 = vsel %vm357, %v346, %v348
      %v362 = vsel %vm357, %v348, %v350
      %v363 = vsel %vm357, %v350, %v352
      %v364 = vsel %vm357, %v352, %v354
      %v365 = vsel %vm357, %v354, %v356
      %366 = vrot.lane.b32.xlu0 %v224, 56
      %v367 = vpop.permute.xlu0 %366
      %368 = vrot.lane.b32.xlu0 %v225, 56
      %v369 = vpop.permute.xlu0 %368
      %370 = vrot.lane.b32.xlu0 %v189, 56
      %v371 = vpop.permute.xlu0 %370
      %372 = vrot.lane.b32.xlu0 %v197, 56
      %v373 = vpop.permute.xlu0 %372
      %374 = vrot.lane.b32.xlu0 %v233, 56
      %v375 = vpop.permute.xlu0 %374
      %376 = vrot.lane.b32.xlu0 %v234, 56
      %v377 = vpop.permute.xlu0 %376
      %378 = vrot.lane.b32.xlu0 %v206, 56
      %v379 = vpop.permute.xlu0 %378
      %380 = vrot.lane.b32.xlu0 %v214, 56
      %v381 = vpop.permute.xlu0 %380
      %382 = vrot.lane.b32.xlu0 %v242, 56
      %v383 = vpop.permute.xlu0 %382
      %vm384 = vcmask 457728
      %v385 = vsel %vm384, %v367, %v369
      %v386 = vsel %vm384, %v369, %v371
      %v387 = vsel %vm384, %v371, %v373
      %v388 = vsel %vm384, %v373, %v375
      %v389 = vsel %vm384, %v375, %v377
      %v390 = vsel %vm384, %v377, %v379
      %v391 = vsel %vm384, %v379, %v381
      %v392 = vsel %vm384, %v381, %v383
      %v396 = vcombine.high %v177, %v177
      %v398 = vunpack.c.l.s4 1983009808
      %v399 = vunpack.c.0.s8 %v398
      %v400 = vlaneseq
      %v401 = vshrl.u32 %v400, 7
      %v402 = vsub.s32 %v399, %v401
      %v403 = vrot.slane %v177, %v402
      %v405 = vunpack.c.l.s4 1983009808
      %v406 = vunpack.c.0.s8 %v405
      %v407 = vlaneseq
      %v408 = vshrl.u32 %v407, 7
      %v409 = vsub.s32 %v406, %v408
      %v410 = vrot.slane %v396, %v409
      %v411 = vcombine.low %v403, %v403
      %v412 = vcombine.low %v410, %v410
      %v413 = vcombine.high %v178, %v178
      %v415 = vunpack.c.l.s4 1983009808
      %v416 = vunpack.c.0.s8 %v415
      %v417 = vlaneseq
      %v418 = vshrl.u32 %v417, 7
      %v419 = vsub.s32 %v416, %v418
      %v420 = vrot.slane %v178, %v419
      %v422 = vunpack.c.l.s4 1983009808
      %v423 = vunpack.c.0.s8 %v422
      %v424 = vlaneseq
      %v425 = vshrl.u32 %v424, 7
      %v426 = vsub.s32 %v423, %v425
      %v427 = vrot.slane %v413, %v426
      %v428 = vcombine.low %v420, %v420
      %v429 = vcombine.low %v427, %v427
      %v431 = vunpack.c.l.s4 1983009808
      %v432 = vunpack.c.0.s8 %v431
      %v433 = vlaneseq
      %v434 = vshrl.u32 %v433, 7
      %v435 = vsub.s32 %v432, %v434
      %v436 = vrot.slane %v179, %v435
      %v437 = vcombine.low %v436, %v436
      %438 = vrot.lane.b32.xlu0 %v411, 120
      %v439 = vpop.permute.xlu0 %438
      %440 = vrot.lane.b32.xlu0 %v403, 120
      %v441 = vpop.permute.xlu0 %440
      %442 = vrot.lane.b32.xlu0 %v412, 120
      %v443 = vpop.permute.xlu0 %442
      %444 = vrot.lane.b32.xlu0 %v410, 120
      %v445 = vpop.permute.xlu0 %444
      %446 = vrot.lane.b32.xlu0 %v428, 120
      %v447 = vpop.permute.xlu0 %446
      %448 = vrot.lane.b32.xlu0 %v420, 120
      %v449 = vpop.permute.xlu0 %448
      %450 = vrot.lane.b32.xlu0 %v429, 120
      %v451 = vpop.permute.xlu0 %450
      %452 = vrot.lane.b32.xlu0 %v427, 120
      %v453 = vpop.permute.xlu0 %452
      %454 = vrot.lane.b32.xlu0 %v437, 120
      %v455 = vpop.permute.xlu0 %454
      %vm456 = vcmask 982016
      %v457 = vsel %vm456, %v439, %v441
      %v458 = vsel %vm456, %v441, %v443
      %v459 = vsel %vm456, %v443, %v445
      %v460 = vsel %vm456, %v445, %v447
      %v461 = vsel %vm456, %v447, %v449
      %v462 = vsel %vm456, %v449, %v451
      %v463 = vsel %vm456, %v451, %v453
      %v464 = vsel %vm456, %v453, %v455
      %v465 = vcombine.low %v177, %v177
      %v467 = vunpack.c.l.s4 1983009808
      %v468 = vunpack.c.0.s8 %v467
      %v469 = vlaneseq
      %v470 = vshrl.u32 %v469, 7
      %v471 = vsub.s32 %v468, %v470
      %v472 = vrot.slane %v465, %v471
      %v473 = vcombine.low %v472, %v472
      %v474 = vcombine.low %v178, %v178
      %v476 = vunpack.c.l.s4 1983009808
      %v477 = vunpack.c.0.s8 %v476
      %v478 = vlaneseq
      %v479 = vshrl.u32 %v478, 7
      %v480 = vsub.s32 %v477, %v479
      %v481 = vrot.slane %v474, %v480
      %v482 = vcombine.low %v481, %v481
      %v483 = vcombine.low %v179, %v179
      %v485 = vunpack.c.l.s4 1983009808
      %v486 = vunpack.c.0.s8 %v485
      %v487 = vlaneseq
      %v488 = vshrl.u32 %v487, 7
      %v489 = vsub.s32 %v486, %v488
      %v490 = vrot.slane %v483, %v489
      %v491 = vcombine.low %v490, %v490
      %492 = vrot.lane.b32.xlu0 %v473, 118
      %v493 = vpop.permute.xlu0 %492
      %494 = vrot.lane.b32.xlu0 %v472, 118
      %v495 = vpop.permute.xlu0 %494
      %496 = vrot.lane.b32.xlu0 %v411, 118
      %v497 = vpop.permute.xlu0 %496
      %498 = vrot.lane.b32.xlu0 %v403, 118
      %v499 = vpop.permute.xlu0 %498
      %500 = vrot.lane.b32.xlu0 %v482, 118
      %v501 = vpop.permute.xlu0 %500
      %502 = vrot.lane.b32.xlu0 %v481, 118
      %v503 = vpop.permute.xlu0 %502
      %504 = vrot.lane.b32.xlu0 %v428, 118
      %v505 = vpop.permute.xlu0 %504
      %506 = vrot.lane.b32.xlu0 %v420, 118
      %v507 = vpop.permute.xlu0 %506
      %508 = vrot.lane.b32.xlu0 %v491, 118
      %v509 = vpop.permute.xlu0 %508
      %vm510 = vcmask 965632
      %v511 = vsel %vm510, %v493, %v495
      %v512 = vsel %vm510, %v495, %v497
      %v513 = vsel %vm510, %v497, %v499
      %v514 = vsel %vm510, %v499, %v501
      %v515 = vsel %vm510, %v501, %v503
      %v516 = vsel %vm510, %v503, %v505
      %v517 = vsel %vm510, %v505, %v507
      %v518 = vsel %vm510, %v507, %v509
      %v519 = vcombine.high %v403, %v403
      %v520 = vcombine.high %v410, %v410
      %v521 = vcombine.high %v420, %v420
      %v522 = vcombine.high %v427, %v427
      %523 = vrot.lane.b32.xlu0 %v403, 116
      %v524 = vpop.permute.xlu0 %523
      %525 = vrot.lane.b32.xlu0 %v519, 116
      %v526 = vpop.permute.xlu0 %525
      %527 = vrot.lane.b32.xlu0 %v410, 116
      %v528 = vpop.permute.xlu0 %527
      %529 = vrot.lane.b32.xlu0 %v520, 116
      %v530 = vpop.permute.xlu0 %529
      %531 = vrot.lane.b32.xlu0 %v420, 116
      %v532 = vpop.permute.xlu0 %531
      %533 = vrot.lane.b32.xlu0 %v521, 116
      %v534 = vpop.permute.xlu0 %533
      %535 = vrot.lane.b32.xlu0 %v427, 116
      %v536 = vpop.permute.xlu0 %535
      %537 = vrot.lane.b32.xlu0 %v522, 116
      %v538 = vpop.permute.xlu0 %537
      %539 = vrot.lane.b32.xlu0 %v436, 116
      %v540 = vpop.permute.xlu0 %539
      %vm541 = vcmask 949248
      %v542 = vsel %vm541, %v524, %v526
      %v543 = vsel %vm541, %v526, %v528
      %v544 = vsel %vm541, %v528, %v530
      %v545 = vsel %vm541, %v530, %v532
      %v546 = vsel %vm541, %v532, %v534
      %v547 = vsel %vm541, %v534, %v536
      %v548 = vsel %vm541, %v536, %v538
      %v549 = vsel %vm541, %v538, %v540
      %vm550 = vcmask 1041408
      %v553 = vsel %vm550, %v189, %v269
      %v556 = vsel %vm550, %v197, %v270
      %v559 = vsel %vm550, %v196, %v271
      %v562 = vsel %vm550, %v198, %v272
      %v565 = vsel %vm550, %v206, %v273
      %v568 = vsel %vm550, %v214, %v274
      %v571 = vsel %vm550, %v213, %v275
      %v574 = vsel %vm550, %v215, %v276
      %vm575 = vcmask 1043456
      %v577 = vsel %vm575, %v553, %v301
      %v579 = vsel %vm575, %v556, %v302
      %v581 = vsel %vm575, %v559, %v303
      %v583 = vsel %vm575, %v562, %v304
      %v585 = vsel %vm575, %v565, %v305
      %v587 = vsel %vm575, %v568, %v306
      %v589 = vsel %vm575, %v571, %v307
      %v591 = vsel %vm575, %v574, %v308
      %vm592 = vcmask 1045504
      %v594 = vsel %vm592, %v577, %v331
      %v597 = vsel %vm592, %v579, %v332
      %v600 = vsel %vm592, %v581, %v333
      %v603 = vsel %vm592, %v583, %v334
      %v606 = vsel %vm592, %v585, %v335
      %v609 = vsel %vm592, %v587, %v336
      %v612 = vsel %vm592, %v589, %v337
      %v615 = vsel %vm592, %v591, %v338
      %v619 = vsel %vm550, %v358, %v385
      %v622 = vsel %vm550, %v359, %v386
      %v625 = vsel %vm550, %v360, %v387
      %v628 = vsel %vm550, %v361, %v388
      %v631 = vsel %vm550, %v362, %v389
      %v634 = vsel %vm550, %v363, %v390
      %v637 = vsel %vm550, %v364, %v391
      %v640 = vsel %vm550, %v365, %v392
      %v642 = vsel %vm575, %v619, %v457
      %v644 = vsel %vm575, %v622, %v458
      %v646 = vsel %vm575, %v625, %v459
      %v648 = vsel %vm575, %v628, %v460
      %v650 = vsel %vm575, %v631, %v461
      %v652 = vsel %vm575, %v634, %v462
      %v654 = vsel %vm575, %v637, %v463
      %v656 = vsel %vm575, %v640, %v464
      %v658 = vsel %vm592, %v642, %v511
      %v661 = vsel %vm592, %v644, %v512
      %v664 = vsel %vm592, %v646, %v513
      %v667 = vsel %vm592, %v648, %v514
      %v670 = vsel %vm592, %v650, %v515
      %v673 = vsel %vm592, %v652, %v516
      %v676 = vsel %vm592, %v654, %v517
      %v679 = vsel %vm592, %v656, %v518
      %682 = vset.pattern.permute.xlu0 0
      %683 = vperm.xlu0 %682, %v173
      %v684 = vpop.permute.xlu0 %683
      %vm686 = vcmask 293888
      %v688 = vsel %vm686, %v172, 0
      %v691 = vsel %vm550, %v542, 0
      %v694 = vsel %vm550, %v543, 0
      %v697 = vsel %vm550, %v544, 0
      %v700 = vsel %vm550, %v545, 0
      %v703 = vsel %vm550, %v546, 0
      %v706 = vsel %vm550, %v547, 0
      %v709 = vsel %vm550, %v548, 0
      %v712 = vsel %vm550, %v549, 0
      %714 = vmatprep.subr.bf16.mxu0 %v597
      %715 = vmatpush1.bf16.msra.mxu0 %v594
      %716 = vmatprep.subr.bf16.mxu0 %v661
      %717 = vmatpush1.bf16.msra.mxu0 %v658
      %718 = vmatprep.subr.bf16.mxu0 %v694
      %719 = vmatpush1.bf16.msra.mxu0 %v691
      %720 = vmatprep.subr.bf16.mxu0 0
      %721 = vmatpush1.bf16.msra.mxu0 0
      %722 = vmatprep.subr.bf16.mxu0 0
      %723 = vmatpush1.bf16.msra.mxu0 0
      %724 = vmatprep.subr.bf16.mxu0 0
      %725 = vmatpush1.bf16.msra.mxu0 0
      %726 = vmatprep.subr.bf16.mxu0 0
      %727 = vmatpush1.bf16.msra.mxu0 0
      %728 = vmatprep.subr.bf16.mxu0 0
      %729 = vmatpush1.bf16.msra.mxu0 0
      %730 = vmatprep.subr.bf16.mxu0 0
      %731 = vmatpush1.bf16.msra.mxu0 0
      %732 = vmatprep.subr.bf16.mxu0 0
      %733 = vmatpush1.bf16.msra.mxu0 0
      %734 = vmatprep.subr.bf16.mxu0 0
      %735 = vmatpush1.bf16.msra.mxu0 0
      %736 = vmatprep.subr.bf16.mxu0 0
      %737 = vmatpush1.bf16.msra.mxu0 0
      %738 = vmatprep.subr.bf16.mxu0 0
      %739 = vmatpush1.bf16.msra.mxu0 0
      %740 = vmatprep.subr.bf16.mxu0 0
      %741 = vmatpush1.bf16.msra.mxu0 0
      %742 = vmatprep.subr.bf16.mxu0 0
      %743 = vmatpush1.bf16.msra.mxu0 0
      %744 = vmatprep.subr.bf16.mxu0 0
      %745 = vmatpush1.bf16.msra.mxu0 0
      %746 = vmatprep.mubr.bf16.mxu0 0
      %747 = vmatmul.mubr.bf16.gmra.mrb[0].mxu0 %v688
      %v748 = vpop.f32.mrb[0].mxu0
      %v749 = vadd.f32 %v684, %v748
      %v750 = vpop.f32.mrb[0].mxu0
      %v751 = vadd.f32 %v684, %v750
      %v752 = vpop.f32.mrb[0].mxu0
      %v753 = vpop.f32.mrb[0].mxu0
      %754 = vdwg.mxu0
      %755 = vmatprep.subr.bf16.mxu0 %v603
      %756 = vmatpush1.bf16.msra.mxu0 %v600
      %757 = vmatprep.subr.bf16.mxu0 %v667
      %758 = vmatpush1.bf16.msra.mxu0 %v664
      %759 = vmatprep.subr.bf16.mxu0 %v700
      %760 = vmatpush1.bf16.msra.mxu0 %v697
      %761 = vmatprep.subr.bf16.mxu0 0
      %762 = vmatpush1.bf16.msra.mxu0 0
      %763 = vmatprep.subr.bf16.mxu0 0
      %764 = vmatpush1.bf16.msra.mxu0 0
      %765 = vmatprep.subr.bf16.mxu0 0
      %766 = vmatpush1.bf16.msra.mxu0 0
      %767 = vmatprep.subr.bf16.mxu0 0
      %768 = vmatpush1.bf16.msra.mxu0 0
      %769 = vmatprep.subr.bf16.mxu0 0
      %770 = vmatpush1.bf16.msra.mxu0 0
      %771 = vmatprep.subr.bf16.mxu0 0
      %772 = vmatpush1.bf16.msra.mxu0 0
      %773 = vmatprep.subr.bf16.mxu0 0
      %774 = vmatpush1.bf16.msra.mxu0 0
      %775 = vmatprep.subr.bf16.mxu0 0
      %776 = vmatpush1.bf16.msra.mxu0 0
      %777 = vmatprep.subr.bf16.mxu0 0
      %778 = vmatpush1.bf16.msra.mxu0 0
      %779 = vmatprep.subr.bf16.mxu0 0
      %780 = vmatpush1.bf16.msra.mxu0 0
      %781 = vmatprep.subr.bf16.mxu0 0
      %782 = vmatpush1.bf16.msra.mxu0 0
      %783 = vmatprep.subr.bf16.mxu0 0
      %784 = vmatpush1.bf16.msra.mxu0 0
      %785 = vmatprep.subr.bf16.mxu0 0
      %786 = vmatpush1.bf16.msra.mxu0 0
      %787 = vmatprep.mubr.bf16.mxu0 0
      %788 = vmatmul.mubr.bf16.gmra.mrb[0].mxu0 %v688
      %v789 = vpop.f32.mrb[0].mxu0
      %v790 = vadd.f32 %v684, %v789
      %v791 = vpop.f32.mrb[0].mxu0
      %v792 = vadd.f32 %v684, %v791
      %v793 = vpop.f32.mrb[0].mxu0
      %v794 = vpop.f32.mrb[0].mxu0
      %795 = vdwg.mxu0
      %796 = vmatprep.subr.bf16.mxu0 %v609
      %797 = vmatpush1.bf16.msra.mxu0 %v606
      %798 = vmatprep.subr.bf16.mxu0 %v673
      %799 = vmatpush1.bf16.msra.mxu0 %v670
      %800 = vmatprep.subr.bf16.mxu0 %v706
      %801 = vmatpush1.bf16.msra.mxu0 %v703
      %802 = vmatprep.subr.bf16.mxu0 0
      %803 = vmatpush1.bf16.msra.mxu0 0
      %804 = vmatprep.subr.bf16.mxu0 0
      %805 = vmatpush1.bf16.msra.mxu0 0
      %806 = vmatprep.subr.bf16.mxu0 0
      %807 = vmatpush1.bf16.msra.mxu0 0
      %808 = vmatprep.subr.bf16.mxu0 0
      %809 = vmatpush1.bf16.msra.mxu0 0
      %810 = vmatprep.subr.bf16.mxu0 0
      %811 = vmatpush1.bf16.msra.mxu0 0
      %812 = vmatprep.subr.bf16.mxu0 0
      %813 = vmatpush1.bf16.msra.mxu0 0
      %814 = vmatprep.subr.bf16.mxu0 0
      %815 = vmatpush1.bf16.msra.mxu0 0
      %816 = vmatprep.subr.bf16.mxu0 0
      %817 = vmatpush1.bf16.msra.mxu0 0
      %818 = vmatprep.subr.bf16.mxu0 0
      %819 = vmatpush1.bf16.msra.mxu0 0
      %820 = vmatprep.subr.bf16.mxu0 0
      %821 = vmatpush1.bf16.msra.mxu0 0
      %822 = vmatprep.subr.bf16.mxu0 0
      %823 = vmatpush1.bf16.msra.mxu0 0
      %824 = vmatprep.subr.bf16.mxu0 0
      %825 = vmatpush1.bf16.msra.mxu0 0
      %826 = vmatprep.subr.bf16.mxu0 0
      %827 = vmatpush1.bf16.msra.mxu0 0
      %828 = vmatprep.mubr.bf16.mxu0 0
      %829 = vmatmul.mubr.bf16.gmra.mrb[0].mxu0 %v688
      %v830 = vpop.f32.mrb[0].mxu0
      %v831 = vadd.f32 %v684, %v830
      %v832 = vpop.f32.mrb[0].mxu0
      %v833 = vadd.f32 %v684, %v832
      %v834 = vpop.f32.mrb[0].mxu0
      %v835 = vpop.f32.mrb[0].mxu0
      %836 = vdwg.mxu0
      %837 = vmatprep.subr.bf16.mxu0 %v615
      %838 = vmatpush1.bf16.msra.mxu0 %v612
      %839 = vmatprep.subr.bf16.mxu0 %v679
      %840 = vmatpush1.bf16.msra.mxu0 %v676
      %841 = vmatprep.subr.bf16.mxu0 %v712
      %842 = vmatpush1.bf16.msra.mxu0 %v709
      %843 = vmatprep.subr.bf16.mxu0 0
      %844 = vmatpush1.bf16.msra.mxu0 0
      %845 = vmatprep.subr.bf16.mxu0 0
      %846 = vmatpush1.bf16.msra.mxu0 0
      %847 = vmatprep.subr.bf16.mxu0 0
      %848 = vmatpush1.bf16.msra.mxu0 0
      %849 = vmatprep.subr.bf16.mxu0 0
      %850 = vmatpush1.bf16.msra.mxu0 0
      %851 = vmatprep.subr.bf16.mxu0 0
      %852 = vmatpush1.bf16.msra.mxu0 0
      %853 = vmatprep.subr.bf16.mxu0 0
      %854 = vmatpush1.bf16.msra.mxu0 0
      %855 = vmatprep.subr.bf16.mxu0 0
      %856 = vmatpush1.bf16.msra.mxu0 0
      %857 = vmatprep.subr.bf16.mxu0 0
      %858 = vmatpush1.bf16.msra.mxu0 0
      %859 = vmatprep.subr.bf16.mxu0 0
      %860 = vmatpush1.bf16.msra.mxu0 0
      %861 = vmatprep.subr.bf16.mxu0 0
      %862 = vmatpush1.bf16.msra.mxu0 0
      %863 = vmatprep.subr.bf16.mxu0 0
      %864 = vmatpush1.bf16.msra.mxu0 0
      %865 = vmatprep.subr.bf16.mxu0 0
      %866 = vmatpush1.bf16.msra.mxu0 0
      %867 = vmatprep.subr.bf16.mxu0 0
      %868 = vmatpush1.bf16.msra.mxu0 0
      %869 = vmatprep.mubr.bf16.mxu0 0
      %870 = vmatmul.mubr.bf16.gmra.mrb[0].mxu0 %v688
      %v871 = vpop.f32.mrb[0].mxu0
      %v872 = vadd.f32 %v684, %v871
      %v873 = vpop.f32.mrb[0].mxu0
      %v874 = vadd.f32 %v684, %v873
      %v875 = vpop.f32.mrb[0].mxu0
      %v876 = vpop.f32.mrb[0].mxu0
      %877 = vdwg.mxu0
      %vm878 = vcmp.gt.f32.partialorder %v749, 0.0
      %vm879 = vcmp.gt.f32.partialorder %v751, 0.0
      %vm880 = vcmp.gt.f32.partialorder %v790, 0.0
      %vm881 = vcmp.gt.f32.partialorder %v792, 0.0
      %vm882 = vcmp.gt.f32.partialorder %v831, 0.0
      %vm883 = vcmp.gt.f32.partialorder %v833, 0.0
      %vm884 = vcmp.gt.f32.partialorder %v872, 0.0
      %vm885 = vcmp.gt.f32.partialorder %v874, 0.0
      %v886 = vmin.f32 %v749, 0.0
      %v887 = vmin.f32 %v751, 0.0
      %v888 = vmin.f32 %v790, 0.0
      %v889 = vmin.f32 %v792, 0.0
      %v890 = vmin.f32 %v831, 0.0
      %v891 = vmin.f32 %v833, 0.0
      %v892 = vmin.f32 %v872, 0.0
      %v893 = vmin.f32 %v874, 0.0
      %v894 = vmul.f32 %v886, 1.442695
      %v895 = vpow.pop %v894
      %v896 = vmul.f32 %v887, 1.442695
      %v897 = vpow.pop %v896
      %v898 = vmul.f32 %v888, 1.442695
      %v899 = vpow.pop %v898
      %v900 = vmul.f32 %v889, 1.442695
      %v901 = vpow.pop %v900
      %v902 = vmul.f32 %v890, 1.442695
      %v903 = vpow.pop %v902
      %v904 = vmul.f32 %v891, 1.442695
      %v905 = vpow.pop %v904
      %v906 = vmul.f32 %v892, 1.442695
      %v907 = vpow.pop %v906
      %v908 = vmul.f32 %v893, 1.442695
      %v909 = vpow.pop %v908
      %v910 = vsub.f32 %v895, 1.0
      %v911 = vsub.f32 %v897, 1.0
      %v912 = vsub.f32 %v899, 1.0
      %v913 = vsub.f32 %v901, 1.0
      %v914 = vsub.f32 %v903, 1.0
      %v915 = vsub.f32 %v905, 1.0
      %v916 = vsub.f32 %v907, 1.0
      %v917 = vsub.f32 %v909, 1.0
      %v918 = vsel %vm878, %v749, %v910
      %v919 = vsel %vm879, %v751, %v911
      %v920 = vsel %vm880, %v790, %v912
      %v921 = vsel %vm881, %v792, %v913
      %v922 = vsel %vm882, %v831, %v914
      %v923 = vsel %vm883, %v833, %v915
      %v924 = vsel %vm884, %v872, %v916
      %v925 = vsel %vm885, %v874, %v917
      %v926 = vpack.c.bf16 %v918, %v918
      %v927 = vpack.c.bf16 %v919, %v919
      %v928 = vpack.c.bf16 %v920, %v920
      %v929 = vpack.c.bf16 %v921, %v921
      %v930 = vpack.c.bf16 %v922, %v922
      %v931 = vpack.c.bf16 %v923, %v923
      %v932 = vpack.c.bf16 %v924, %v924
      %v933 = vpack.c.bf16 %v925, %v925
      %v942 = vunpack.c.l.b16 %v926
      %v943 = vunpack.c.l.b16 %v927
      %v944 = vunpack.c.l.b16 %v928
      %v945 = vunpack.c.l.b16 %v929
      %v946 = vunpack.c.l.b16 %v930
      %v947 = vunpack.c.l.b16 %v931
      %v948 = vunpack.c.l.b16 %v932
      %v949 = vunpack.c.l.b16 %v933
      %v950 = vpack.c.b16 %v943, %v942
      %v951 = vpack.c.b16 %v945, %v944
      %v952 = vpack.c.b16 %v947, %v946
      %v953 = vpack.c.b16 %v949, %v948
      %958 = vst [vmem:[%s170] sm:$0xff] %v950
      %959 = vst [vmem:[%s170 + $0x8] sm:$0xff] %v951
      %960 = vst [vmem:[%s170 + $0x10] sm:$0xff] %v952
      %961 = vst [vmem:[%s170 + $0x18] sm:$0xff] %v953
      %p962 = scmp.lt.s32.totalorder %s14, 1
      %s963 = scalar_select %p962, %s14, 1
      %s964 = smul.addr %s963, 8
      %s965 = smul.addr %s964, 4
      %s966 = scalar_lea.vmem %s3, %s965
      // Predicated region
      $region33: #{upconv_dilate_forward.1} parent=31 // pred_check
        %p967 = pneg %p100
      $region34: #{upconv_dilate_forward.1} parent=31 // pred_check_branch
        %969 = sbr.rel (%p967) target = $region36
      $region35: #{upconv_dilate_forward.1} parent=31 // pred_region
        _
      $region36: #{upconv_dilate_forward.1} parent=31 // pred_fallthru
        _
    $region32: #{upconv_dilate_forward.1} parent=5 // pred_fallthru
      _
    %p970 = scmp.le.s32.totalorder 2, %s9
    // Predicated region
    $region37: #{upconv_dilate_forward.1} parent=5 // pred_check
      %p971 = pneg %p970
    $region38: #{upconv_dilate_forward.1} parent=5 // pred_check_branch
      %973 = sbr.rel (%p971) target = $region40
    $region39: #{upconv_dilate_forward.1} parent=5 // pred_region
      %s974 = ssub.s32 %s9, 2
      // Predicated region
      $region41: #{upconv_dilate_forward.1} parent=39 // pred_check
        %p975 = pneg %p106
      $region42: #{upconv_dilate_forward.1} parent=39 // pred_check_branch
        %977 = sbr.rel (%p975) target = $region44
      $region43: #{upconv_dilate_forward.1} parent=39 // pred_region
        %p978 = scmp.lt.s32.totalorder %s15, 1
        %s979 = scalar_select %p978, %s15, 1
        %s980 = smul.addr %s979, 8
        %s981 = smul.addr %s980, 4
        %s982 = scalar_lea.vmem %s3, %s981
      $region44: #{upconv_dilate_forward.1} parent=39 // pred_fallthru
        _
    $region40: #{upconv_dilate_forward.1} parent=5 // pred_fallthru
      _
  $region6: #{upconv_dilate_forward.1} parent=0 // loop_footer
    %s13 = sadd.s32 1, %s9
  $region7: #{upconv_dilate_forward.1} parent=0 // loop_footer_branch
    %8 = sbr.rel target = $region3
  $region8: #{upconv_dilate_forward.1} parent=0 // loop_exit
    _

</llo_original>
